<compile_context>
chip_gen: v7x
topology: tpu7x:2x2x1
jax: 0.10.0
libtpu: 0.0.40
codegen_flags: <defaults>
</compile_context>

<pallas_src>
import functools

import jax
import jax.numpy as jnp
from jax import lax
from jax.experimental import pallas as pl
from jax.experimental.pallas import tpu as pltpu


def _conv_relu_kernel(x_ref, w_ref, b_ref, o_ref, xpad_ref, patch_ref, *,
                      K, H, W, PAD, relu):
    """One batch element per (parallel) grid step, lane-dense (Cout, H*W) result.

    x_ref    : (1, Cin, H*W)        unpadded input, spatial flattened into lanes
    w_ref    : (Cout, K*K*Cin)      weight with all taps folded into contraction
    b_ref    : (Cout, 1)            bias (broadcast along lanes)
    o_ref    : (1, Cout, H*W)       output — last dim H*W >= 128 => dense vst
    xpad_ref : (Cin, H*W + 2*PAD)   VMEM scratch: zero halo + image (fused pad)
    patch_ref: (K*K*Cin, H*W)       VMEM scratch: im2col patch for one matmul
    """
    Cin = x_ref.shape[1]
    HW = H * W
    half = K // 2

    # Fused zero padding: zero the halo, copy the image into the middle
    # (PAD is a multiple of 128 so this store is lane-aligned).
    xpad_ref[...] = jnp.zeros_like(xpad_ref)
    xpad_ref[:, pl.ds(PAD, HW)] = x_ref[0]

    # Column index of every flattened output position (left/right edge masks).
    wo = lax.broadcasted_iota(jnp.int32, (1, HW), 1) % W

    # Build the (K*K*Cin, HW) patch: each tap is a static lane-shifted view of
    # the padded buffer.  Vertical out-of-range taps read the zero halo;
    # horizontal out-of-range taps are masked on the row edges.
    for kh in range(K):
        for kw in range(K):
            dh = kh - half
            dw = kw - half
            shift = dh * W + dw                              # static Python int
            win = xpad_ref[:, pl.ds(PAD + shift, HW)]        # (Cin, HW)
            if dw != 0:
                ok = jnp.logical_and(wo + dw >= 0, wo + dw < W)
                win = jnp.where(ok, win, 0.0)
            patch_ref[pl.ds((kh * K + kw) * Cin, Cin), :] = win

    # Single MXU matmul: contraction = K*K*Cin, output lane dim = H*W (dense),
    # instead of K*K tiny matmuls with contraction = Cin.
    acc = jnp.dot(w_ref[...], patch_ref[...], preferred_element_type=jnp.float32)
    acc = acc + b_ref[...]                                   # (Cout, 1) broadcast
    if relu:
        acc = jnp.maximum(acc, 0.0)
    o_ref[0] = acc.astype(o_ref.dtype)                       # (Cout, HW) dense store


def convolve(x, w, b, *, relu=True):
    """Equivalent of Convolve.forward: Conv2d(padding=1 if k==3 else 0, bias) + optional ReLU.

    x: (N, Cin, H, W) NCHW, w: (Cout, Cin, K, K) OIHW, b: (Cout,)
    returns (N, Cout, H, W) NCHW (stride 1; 'same' shape for K in {1, 3}).
    """
    N, Cin, H, W = x.shape
    Cout, Cin_w, K, K2 = w.shape
    assert Cin_w == Cin and K == K2
    if K not in (1, 3):
        # TODO(synk): the flat-lane shift trick requires output width == input
        # width (K=3/pad=1 or K=1/pad=0); other kernel sizes (valid conv,
        # Wo != W) would need an Ho/Wo-tiled kernel variant.
        raise NotImplementedError("convolve kernel supports kernel_size 1 or 3")

    HW = H * W
    # Halo big enough for the largest tap shift (W+1), rounded up to a lane
    # tile so the in-kernel image copy stays lane-aligned.
    PAD = ((W + 1 + 127) // 128) * 128 if K == 3 else 0

    # Free metadata reshapes only (no transposes, no jnp.pad => no extra HBM passes).
    x_flat = x.reshape(N, Cin, HW)
    # OIHW -> (Cout, (kh*K + kw)*Cin + c) to match the patch row order.
    w_flat = jnp.transpose(w, (0, 2, 3, 1)).reshape(Cout, K * K * Cin)
    b_col = b.reshape(Cout, 1)

    out = pl.pallas_call(
        functools.partial(_conv_relu_kernel, K=K, H=H, W=W, PAD=PAD, relu=relu),
        out_shape=jax.ShapeDtypeStruct((N, Cout, HW), x.dtype),
        grid=(N,),
        in_specs=[
            pl.BlockSpec((1, Cin, HW), lambda n: (n, 0, 0)),
            pl.BlockSpec((Cout, K * K * Cin), lambda n: (0, 0)),
            pl.BlockSpec((Cout, 1), lambda n: (0, 0)),
        ],
        out_specs=pl.BlockSpec((1, Cout, HW), lambda n: (n, 0, 0)),
        scratch_shapes=[
            pltpu.VMEM((Cin, HW + 2 * PAD), x.dtype),
            pltpu.VMEM((K * K * Cin, HW), x.dtype),
        ],
        compiler_params=pltpu.CompilerParams(dimension_semantics=("parallel",)),
    )(x_flat, w_flat, b_col)

    # Free metadata reshape back to NCHW (Ho=H, Wo=W for K in {1,3}).
    return out.reshape(N, Cout, H, W)


if __name__ == "__main__":
    key = jax.random.PRNGKey(0)
    kx, kwt, kb = jax.random.split(key, 3)

    # Small shapes consistent with the module: batch=2, in=4, out=8, 16x16, k=3.
    N, Cin, H, W = 2, 4, 16, 16
    Cout, K = 8, 3

    x = jax.random.normal(kx, (N, Cin, H, W), jnp.float32)

    # Deterministic kaiming_normal_(mode='fan_out', nonlinearity='relu'):
    # std = sqrt(2 / fan_out), fan_out = Cout * K * K
    fan_out = Cout * K * K
    w = jax.random.normal(kwt, (Cout, Cin, K, K), jnp.float32) * (2.0 / fan_out) ** 0.5
    # PyTorch Conv2d default bias init: U(-1/sqrt(fan_in), 1/sqrt(fan_in))
    fan_in = Cin * K * K
    bound = 1.0 / (fan_in ** 0.5)
    b = jax.random.uniform(kb, (Cout,), jnp.float32, -bound, bound)

    y = convolve(x, w, b, relu=True)
    y = jax.block_until_ready(y)

    # Pure-JAX reference for sanity.
    ref = lax.conv_general_dilated(
        x, w, window_strides=(1, 1), padding=[(1, 1), (1, 1)],
        dimension_numbers=("NCHW", "OIHW", "NCHW"),
        precision=lax.Precision.HIGHEST)
    ref = jnp.maximum(ref + b[None, :, None, None], 0.0)
    assert y.shape == (N, Cout, H, W)
    assert jnp.allclose(y, ref, atol=1e-4, rtol=1e-4), "mismatch vs reference conv"

    print("KERNEL_OK")
</pallas_src>

<mosaic_0001>
module attributes {stable_mosaic.version = 11 : i64} {
  func.func @_conv_relu_kernel(%arg0: i32, %arg1: memref<1x4x256xf32, #tpu.memory_space<vmem>>, %arg2: memref<8x36xf32, #tpu.memory_space<vmem>>, %arg3: memref<8x1xf32, #tpu.memory_space<vmem>>, %arg4: memref<1x8x256xf32, #tpu.memory_space<vmem>>, %arg5: memref<4x512xf32, #tpu.memory_space<vmem>>, %arg6: memref<36x256xf32, #tpu.memory_space<vmem>>) attributes {dimension_semantics = [#tpu.dimension_semantics<parallel>], iteration_bounds = array<i64: 2>, scalar_prefetch = 0 : i64, scratch_operands = 2 : i64, tpu.core_type = #tpu.core_type<tc>, window_params = [{transform_indices = @transform_0, window_bounds = array<i64: 1, 4, 256>}, {pipeline_mode = #tpu.pipeline_mode<synchronous>, transform_indices = @transform_1, window_bounds = array<i64: 8, 36>}, {pipeline_mode = #tpu.pipeline_mode<synchronous>, transform_indices = @transform_2, window_bounds = array<i64: 8, 1>}, {transform_indices = @transform_3, window_bounds = array<i64: 1, 8, 256>}]} {
    %cst = arith.constant 0.000000e+00 : f32
    %0 = vector.broadcast %cst : f32 to vector<4x512xf32>
    %c0 = arith.constant 0 : index
    %c0_0 = arith.constant 0 : index
    %1 = vector.load %arg5[%c0, %c0_0] : memref<4x512xf32, #tpu.memory_space<vmem>>, vector<4x512xf32>
    tpu.vector_store %arg5[%c0, %c0_0], %0 {strides = array<i32>} : memref<4x512xf32, #tpu.memory_space<vmem>>, vector<4x512xf32>,
    %c0_1 = arith.constant 0 : index
    %c0_2 = arith.constant 0 : index
    %c0_3 = arith.constant 0 : index
    %2 = vector.load %arg1[%c0_1, %c0_2, %c0_3] : memref<1x4x256xf32, #tpu.memory_space<vmem>>, vector<1x4x256xf32>
    %3 = vector.shape_cast %2 : vector<1x4x256xf32> to vector<4x256xf32>
    %c0_4 = arith.constant 0 : index
    %c128 = arith.constant 128 : index
    %4 = vector.load %arg5[%c0_4, %c128] : memref<4x512xf32, #tpu.memory_space<vmem>>, vector<4x256xf32>
    tpu.vector_store %arg5[%c0_4, %c128], %3 {strides = array<i32>} : memref<4x512xf32, #tpu.memory_space<vmem>>, vector<4x256xf32>,
    %5 = tpu.iota {dimensions = array<i32: 1>} : vector<1x256xi32>
    %c16_i32 = arith.constant 16 : i32
    %c0_i32 = arith.constant 0 : i32
    %6 = arith.cmpi eq, %c16_i32, %c0_i32 : i32
    %c1_i32 = arith.constant 1 : i32
    %7 = arith.select %6, %c1_i32, %c16_i32 : i32
    %8 = vector.broadcast %7 : i32 to vector<1x256xi32>
    %9 = arith.remsi %5, %8 : vector<1x256xi32>
    %c0_i32_5 = arith.constant 0 : i32
    %10 = vector.broadcast %c0_i32_5 : i32 to vector<1x256xi32>
    %11 = arith.cmpi ne, %9, %10 : vector<1x256xi32>
    %c0_i32_6 = arith.constant 0 : i32
    %12 = vector.broadcast %c0_i32_6 : i32 to vector<1x256xi32>
    %13 = arith.cmpi slt, %9, %12 : vector<1x256xi32>
    %c0_i32_7 = arith.constant 0 : i32
    %14 = arith.cmpi slt, %7, %c0_i32_7 : i32
    %15 = vector.broadcast %14 : i1 to vector<1x256xi1>
    %16 = vector.broadcast %15 : vector<1x256xi1> to vector<1x256xi1>
    %17 = arith.xori %13, %16 : vector<1x256xi1>
    %18 = arith.andi %17, %11 : vector<1x256xi1>
    %19 = vector.broadcast %7 : i32 to vector<1x256xi32>
    %20 = arith.addi %9, %19 : vector<1x256xi32>
    %21 = arith.select %18, %20, %9 : vector<1x256xi1>, vector<1x256xi32>
    %c0_8 = arith.constant 0 : index
    %c111 = arith.constant 111 : index
    %22 = vector.load %arg5[%c0_8, %c111] : memref<4x512xf32, #tpu.memory_space<vmem>>, vector<4x256xf32>
    %c-1_i32 = arith.constant -1 : i32
    %23 = vector.broadcast %c-1_i32 : i32 to vector<1x256xi32>
    %24 = arith.addi %21, %23 : vector<1x256xi32>
    %c0_i32_9 = arith.constant 0 : i32
    %25 = vector.broadcast %c0_i32_9 : i32 to vector<1x256xi32>
    %26 = arith.cmpi sge, %24, %25 : vector<1x256xi32>
    %c-1_i32_10 = arith.constant -1 : i32
    %27 = vector.broadcast %c-1_i32_10 : i32 to vector<1x256xi32>
    %28 = arith.addi %21, %27 : vector<1x256xi32>
    %c16_i32_11 = arith.constant 16 : i32
    %29 = vector.broadcast %c16_i32_11 : i32 to vector<1x256xi32>
    %30 = arith.cmpi slt, %28, %29 : vector<1x256xi32>
    %31 = arith.andi %26, %30 : vector<1x256xi1>
    %cst_12 = arith.constant 0.000000e+00 : f32
    %32 = vector.shape_cast %31 : vector<1x256xi1> to vector<1x256xi1>
    %33 = vector.broadcast %32 : vector<1x256xi1> to vector<4x256xi1>
    %34 = vector.broadcast %cst_12 : f32 to vector<4x256xf32>
    %35 = arith.select %33, %22, %34 : vector<4x256xi1>, vector<4x256xf32>
    %c0_13 = arith.constant 0 : index
    %c0_14 = arith.constant 0 : index
    %36 = vector.load %arg6[%c0_13, %c0_14] : memref<36x256xf32, #tpu.memory_space<vmem>>, vector<4x256xf32>
    tpu.vector_store %arg6[%c0_13, %c0_14], %35 {strides = array<i32>} : memref<36x256xf32, #tpu.memory_space<vmem>>, vector<4x256xf32>,
    %c0_15 = arith.constant 0 : index
    %c112 = arith.constant 112 : index
    %37 = vector.load %arg5[%c0_15, %c112] : memref<4x512xf32, #tpu.memory_space<vmem>>, vector<4x256xf32>
    %c4 = arith.constant 4 : index
    %c0_16 = arith.constant 0 : index
    %38 = vector.load %arg6[%c4, %c0_16] : memref<36x256xf32, #tpu.memory_space<vmem>>, vector<4x256xf32>
    tpu.vector_store %arg6[%c4, %c0_16], %37 {strides = array<i32>} : memref<36x256xf32, #tpu.memory_space<vmem>>, vector<4x256xf32>,
    %c0_17 = arith.constant 0 : index
    %c113 = arith.constant 113 : index
    %39 = vector.load %arg5[%c0_17, %c113] : memref<4x512xf32, #tpu.memory_space<vmem>>, vector<4x256xf32>
    %c1_i32_18 = arith.constant 1 : i32
    %40 = vector.broadcast %c1_i32_18 : i32 to vector<1x256xi32>
    %41 = arith.addi %21, %40 : vector<1x256xi32>
    %c0_i32_19 = arith.constant 0 : i32
    %42 = vector.broadcast %c0_i32_19 : i32 to vector<1x256xi32>
    %43 = arith.cmpi sge, %41, %42 : vector<1x256xi32>
    %c1_i32_20 = arith.constant 1 : i32
    %44 = vector.broadcast %c1_i32_20 : i32 to vector<1x256xi32>
    %45 = arith.addi %21, %44 : vector<1x256xi32>
    %c16_i32_21 = arith.constant 16 : i32
    %46 = vector.broadcast %c16_i32_21 : i32 to vector<1x256xi32>
    %47 = arith.cmpi slt, %45, %46 : vector<1x256xi32>
    %48 = arith.andi %43, %47 : vector<1x256xi1>
    %cst_22 = arith.constant 0.000000e+00 : f32
    %49 = vector.shape_cast %48 : vector<1x256xi1> to vector<1x256xi1>
    %50 = vector.broadcast %49 : vector<1x256xi1> to vector<4x256xi1>
    %51 = vector.broadcast %cst_22 : f32 to vector<4x256xf32>
    %52 = arith.select %50, %39, %51 : vector<4x256xi1>, vector<4x256xf32>
    %c8 = arith.constant 8 : index
    %c0_23 = arith.constant 0 : index
    %53 = vector.load %arg6[%c8, %c0_23] : memref<36x256xf32, #tpu.memory_space<vmem>>, vector<4x256xf32>
    tpu.vector_store %arg6[%c8, %c0_23], %52 {strides = array<i32>} : memref<36x256xf32, #tpu.memory_space<vmem>>, vector<4x256xf32>,
    %c0_24 = arith.constant 0 : index
    %c127 = arith.constant 127 : index
    %54 = vector.load %arg5[%c0_24, %c127] : memref<4x512xf32, #tpu.memory_space<vmem>>, vector<4x256xf32>
    %c-1_i32_25 = arith.constant -1 : i32
    %55 = vector.broadcast %c-1_i32_25 : i32 to vector<1x256xi32>
    %56 = arith.addi %21, %55 : vector<1x256xi32>
    %c0_i32_26 = arith.constant 0 : i32
    %57 = vector.broadcast %c0_i32_26 : i32 to vector<1x256xi32>
    %58 = arith.cmpi sge, %56, %57 : vector<1x256xi32>
    %c-1_i32_27 = arith.constant -1 : i32
    %59 = vector.broadcast %c-1_i32_27 : i32 to vector<1x256xi32>
    %60 = arith.addi %21, %59 : vector<1x256xi32>
    %c16_i32_28 = arith.constant 16 : i32
    %61 = vector.broadcast %c16_i32_28 : i32 to vector<1x256xi32>
    %62 = arith.cmpi slt, %60, %61 : vector<1x256xi32>
    %63 = arith.andi %58, %62 : vector<1x256xi1>
    %cst_29 = arith.constant 0.000000e+00 : f32
    %64 = vector.shape_cast %63 : vector<1x256xi1> to vector<1x256xi1>
    %65 = vector.broadcast %64 : vector<1x256xi1> to vector<4x256xi1>
    %66 = vector.broadcast %cst_29 : f32 to vector<4x256xf32>
    %67 = arith.select %65, %54, %66 : vector<4x256xi1>, vector<4x256xf32>
    %c12 = arith.constant 12 : index
    %c0_30 = arith.constant 0 : index
    %68 = vector.load %arg6[%c12, %c0_30] : memref<36x256xf32, #tpu.memory_space<vmem>>, vector<4x256xf32>
    tpu.vector_store %arg6[%c12, %c0_30], %67 {strides = array<i32>} : memref<36x256xf32, #tpu.memory_space<vmem>>, vector<4x256xf32>,
    %c0_31 = arith.constant 0 : index
    %c128_32 = arith.constant 128 : index
    %69 = vector.load %arg5[%c0_31, %c128_32] : memref<4x512xf32, #tpu.memory_space<vmem>>, vector<4x256xf32>
    %c16 = arith.constant 16 : index
    %c0_33 = arith.constant 0 : index
    %70 = vector.load %arg6[%c16, %c0_33] : memref<36x256xf32, #tpu.memory_space<vmem>>, vector<4x256xf32>
    tpu.vector_store %arg6[%c16, %c0_33], %69 {strides = array<i32>} : memref<36x256xf32, #tpu.memory_space<vmem>>, vector<4x256xf32>,
    %c0_34 = arith.constant 0 : index
    %c129 = arith.constant 129 : index
    %71 = vector.load %arg5[%c0_34, %c129] : memref<4x512xf32, #tpu.memory_space<vmem>>, vector<4x256xf32>
    %c1_i32_35 = arith.constant 1 : i32
    %72 = vector.broadcast %c1_i32_35 : i32 to vector<1x256xi32>
    %73 = arith.addi %21, %72 : vector<1x256xi32>
    %c0_i32_36 = arith.constant 0 : i32
    %74 = vector.broadcast %c0_i32_36 : i32 to vector<1x256xi32>
    %75 = arith.cmpi sge, %73, %74 : vector<1x256xi32>
    %c1_i32_37 = arith.constant 1 : i32
    %76 = vector.broadcast %c1_i32_37 : i32 to vector<1x256xi32>
    %77 = arith.addi %21, %76 : vector<1x256xi32>
    %c16_i32_38 = arith.constant 16 : i32
    %78 = vector.broadcast %c16_i32_38 : i32 to vector<1x256xi32>
    %79 = arith.cmpi slt, %77, %78 : vector<1x256xi32>
    %80 = arith.andi %75, %79 : vector<1x256xi1>
    %cst_39 = arith.constant 0.000000e+00 : f32
    %81 = vector.shape_cast %80 : vector<1x256xi1> to vector<1x256xi1>
    %82 = vector.broadcast %81 : vector<1x256xi1> to vector<4x256xi1>
    %83 = vector.broadcast %cst_39 : f32 to vector<4x256xf32>
    %84 = arith.select %82, %71, %83 : vector<4x256xi1>, vector<4x256xf32>
    %c20 = arith.constant 20 : index
    %c0_40 = arith.constant 0 : index
    %85 = vector.load %arg6[%c20, %c0_40] : memref<36x256xf32, #tpu.memory_space<vmem>>, vector<4x256xf32>
    tpu.vector_store %arg6[%c20, %c0_40], %84 {strides = array<i32>} : memref<36x256xf32, #tpu.memory_space<vmem>>, vector<4x256xf32>,
    %c0_41 = arith.constant 0 : index
    %c143 = arith.constant 143 : index
    %86 = vector.load %arg5[%c0_41, %c143] : memref<4x512xf32, #tpu.memory_space<vmem>>, vector<4x256xf32>
    %c-1_i32_42 = arith.constant -1 : i32
    %87 = vector.broadcast %c-1_i32_42 : i32 to vector<1x256xi32>
    %88 = arith.addi %21, %87 : vector<1x256xi32>
    %c0_i32_43 = arith.constant 0 : i32
    %89 = vector.broadcast %c0_i32_43 : i32 to vector<1x256xi32>
    %90 = arith.cmpi sge, %88, %89 : vector<1x256xi32>
    %c-1_i32_44 = arith.constant -1 : i32
    %91 = vector.broadcast %c-1_i32_44 : i32 to vector<1x256xi32>
    %92 = arith.addi %21, %91 : vector<1x256xi32>
    %c16_i32_45 = arith.constant 16 : i32
    %93 = vector.broadcast %c16_i32_45 : i32 to vector<1x256xi32>
    %94 = arith.cmpi slt, %92, %93 : vector<1x256xi32>
    %95 = arith.andi %90, %94 : vector<1x256xi1>
    %cst_46 = arith.constant 0.000000e+00 : f32
    %96 = vector.shape_cast %95 : vector<1x256xi1> to vector<1x256xi1>
    %97 = vector.broadcast %96 : vector<1x256xi1> to vector<4x256xi1>
    %98 = vector.broadcast %cst_46 : f32 to vector<4x256xf32>
    %99 = arith.select %97, %86, %98 : vector<4x256xi1>, vector<4x256xf32>
    %c24 = arith.constant 24 : index
    %c0_47 = arith.constant 0 : index
    %100 = vector.load %arg6[%c24, %c0_47] : memref<36x256xf32, #tpu.memory_space<vmem>>, vector<4x256xf32>
    tpu.vector_store %arg6[%c24, %c0_47], %99 {strides = array<i32>} : memref<36x256xf32, #tpu.memory_space<vmem>>, vector<4x256xf32>,
    %c0_48 = arith.constant 0 : index
    %c144 = arith.constant 144 : index
    %101 = vector.load %arg5[%c0_48, %c144] : memref<4x512xf32, #tpu.memory_space<vmem>>, vector<4x256xf32>
    %c28 = arith.constant 28 : index
    %c0_49 = arith.constant 0 : index
    %102 = vector.load %arg6[%c28, %c0_49] : memref<36x256xf32, #tpu.memory_space<vmem>>, vector<4x256xf32>
    tpu.vector_store %arg6[%c28, %c0_49], %101 {strides = array<i32>} : memref<36x256xf32, #tpu.memory_space<vmem>>, vector<4x256xf32>,
    %c0_50 = arith.constant 0 : index
    %c145 = arith.constant 145 : index
    %103 = vector.load %arg5[%c0_50, %c145] : memref<4x512xf32, #tpu.memory_space<vmem>>, vector<4x256xf32>
    %c1_i32_51 = arith.constant 1 : i32
    %104 = vector.broadcast %c1_i32_51 : i32 to vector<1x256xi32>
    %105 = arith.addi %21, %104 : vector<1x256xi32>
    %c0_i32_52 = arith.constant 0 : i32
    %106 = vector.broadcast %c0_i32_52 : i32 to vector<1x256xi32>
    %107 = arith.cmpi sge, %105, %106 : vector<1x256xi32>
    %c1_i32_53 = arith.constant 1 : i32
    %108 = vector.broadcast %c1_i32_53 : i32 to vector<1x256xi32>
    %109 = arith.addi %21, %108 : vector<1x256xi32>
    %c16_i32_54 = arith.constant 16 : i32
    %110 = vector.broadcast %c16_i32_54 : i32 to vector<1x256xi32>
    %111 = arith.cmpi slt, %109, %110 : vector<1x256xi32>
    %112 = arith.andi %107, %111 : vector<1x256xi1>
    %cst_55 = arith.constant 0.000000e+00 : f32
    %113 = vector.shape_cast %112 : vector<1x256xi1> to vector<1x256xi1>
    %114 = vector.broadcast %113 : vector<1x256xi1> to vector<4x256xi1>
    %115 = vector.broadcast %cst_55 : f32 to vector<4x256xf32>
    %116 = arith.select %114, %103, %115 : vector<4x256xi1>, vector<4x256xf32>
    %c32 = arith.constant 32 : index
    %c0_56 = arith.constant 0 : index
    %117 = vector.load %arg6[%c32, %c0_56] : memref<36x256xf32, #tpu.memory_space<vmem>>, vector<4x256xf32>
    tpu.vector_store %arg6[%c32, %c0_56], %116 {strides = array<i32>} : memref<36x256xf32, #tpu.memory_space<vmem>>, vector<4x256xf32>,
    %c0_57 = arith.constant 0 : index
    %c0_58 = arith.constant 0 : index
    %118 = vector.load %arg2[%c0_57, %c0_58] : memref<8x36xf32, #tpu.memory_space<vmem>>, vector<8x36xf32>
    %c0_59 = arith.constant 0 : index
    %c0_60 = arith.constant 0 : index
    %119 = vector.load %arg6[%c0_59, %c0_60] : memref<36x256xf32, #tpu.memory_space<vmem>>, vector<36x256xf32>
    %cst_61 = arith.constant dense<0.000000e+00> : vector<8x256xf32>
    %120 = tpu.matmul %118, %119, %cst_61 {dimension_numbers = #tpu.dot_dimension_numbers<[1], [0], [0], [1], [0, 0, 1, 1], [], []>} : vector<8x36xf32>, vector<36x256xf32>, vector<8x256xf32> -> vector<8x256xf32>
    %c0_62 = arith.constant 0 : index
    %c0_63 = arith.constant 0 : index
    %121 = vector.load %arg3[%c0_62, %c0_63] : memref<8x1xf32, #tpu.memory_space<vmem>>, vector<8x1xf32>
    %122 = vector.broadcast %121 : vector<8x1xf32> to vector<8x256xf32>
    %123 = arith.addf %120, %122 : vector<8x256xf32>
    %cst_64 = arith.constant 0.000000e+00 : f32
    %124 = vector.broadcast %cst_64 : f32 to vector<8x256xf32>
    %125 = arith.maximumf %123, %124 : vector<8x256xf32>
    %c0_65 = arith.constant 0 : index
    %c0_66 = arith.constant 0 : index
    %c0_67 = arith.constant 0 : index
    %126 = vector.load %arg4[%c0_65, %c0_66, %c0_67] : memref<1x8x256xf32, #tpu.memory_space<vmem>>, vector<1x8x256xf32>
    %127 = vector.shape_cast %126 : vector<1x8x256xf32> to vector<8x256xf32>
    %128 = vector.shape_cast %125 : vector<8x256xf32> to vector<1x8x256xf32>
    tpu.vector_store %arg4[%c0_65, %c0_66, %c0_67], %128 {strides = array<i32>} : memref<1x8x256xf32, #tpu.memory_space<vmem>>, vector<1x8x256xf32>,
    return
  }
  func.func @transform_0(%arg0: i32) -> (i32, i32, i32) {
    %c0_i32 = arith.constant 0 : i32
    %c0_i32_0 = arith.constant 0 : i32
    %c0_i32_1 = arith.constant 0 : i32
    return %arg0, %c0_i32, %c0_i32_0 : i32, i32, i32
  }
  func.func @transform_1(%arg0: i32) -> (i32, i32) {
    %c0_i32 = arith.constant 0 : i32
    %c0_i32_0 = arith.constant 0 : i32
    %c0_i32_1 = arith.constant 0 : i32
    return %c0_i32, %c0_i32_0 : i32, i32
  }
  func.func @transform_2(%arg0: i32) -> (i32, i32) {
    %c0_i32 = arith.constant 0 : i32
    %c0_i32_0 = arith.constant 0 : i32
    %c0_i32_1 = arith.constant 0 : i32
    return %c0_i32, %c0_i32_0 : i32, i32
  }
  func.func @transform_3(%arg0: i32) -> (i32, i32, i32) {
    %c0_i32 = arith.constant 0 : i32
    %c0_i32_0 = arith.constant 0 : i32
    %c0_i32_1 = arith.constant 0 : i32
    return %arg0, %c0_i32, %c0_i32_0 : i32, i32, i32
  }
}

</mosaic_0001>

<llo_original>
// kernel: tpu_custom_call.1
$region0: #{tpu_custom_call.1}
  #allocation0 [shape = 'u32[]', space=smem, size = 0x4, offset = 0x4, fixed_abs, tag = 'smem constant byte address 0x4 - core index']
  #allocation1 [shape = 'u32[144,128]{1,0:T(1,128)}', space=vmem, size = 0x12000, scoped, tag = 'internal scratch']
  #allocation2 [shape = 'f32[4,512]{1,0:T(4,128)}', space=vmem, size = 0x2000, scoped, tag = 'scratch operand']
  #allocation3 [shape = 'f32[36,256]{1,0:T(8,128)}', space=vmem, size = 0xa000, scoped, tag = 'scratch operand']
  %s0 = inlined_call_operand.hbm [shape: f32[2,4,256], index: 0, kind: input, shape index: {}]
  %s1 = inlined_call_operand.vmem [shape: f32[8,36], index: 1, kind: input, shape index: {}]
  %s2 = inlined_call_operand.vmem [shape: f32[8,1], index: 2, kind: input, shape index: {}]
  %s3 = inlined_call_operand.hbm [shape: f32[2,8,256], index: 3, kind: output, shape index: {}]
  %s4 = sld [smem:[#allocation0]]
  $region49: #{tpu_custom_call.1} parent=0
    _
  %s6 = ssub.s32 1, %s4
  %s7 = scalar_select 0, %s6, %s4
  $region1: #{tpu_custom_call.1} parent=0
    #allocation4 [shape = 'u8[8192]{0}', space=vmem, size = 0x2000, scoped, tag = 'input window, operand 0']
    #allocation5 [shape = 's32[2]{0}', space=sflag, size = 0x8, scoped, tag = 'scoped memory for tpu_custom_call.1']
    #allocation6 [shape = 's32[2]{0}', space=sflag, size = 0x8, scoped, tag = 'scoped memory for tpu_custom_call.1']
    #allocation7 [shape = 'u8[16384]{0}', space=vmem, size = 0x4000, scoped, tag = 'output window, operand 0']
    %8 = vsyncpa [#allocation5], 0
    %s9 = scalar_lea.sflag [#allocation5], 1
    %10 = vsyncpa %s9, 0
    %11 = vsyncpa [#allocation6], 0
    %s12 = scalar_lea.sflag [#allocation6], 1
    %13 = vsyncpa %s12, 0
    loop: start=0, step=1, limit=4
    $region2: #{tpu_custom_call.1} parent=1 // loop_pre_header
      _
    $region3: #{tpu_custom_call.1} parent=1 // loop_header
      %s15 = sphi 0, %s19
      %p16 = scmp.ge.s32.totalorder %s15, 4
      %s25 = sphi 0, %s27
      %s28 = sphi 0, %s25
      %s29 = sphi 0, %s28
      %s45 = sphi 0, %s29
      %s49 = sphi 0, %s49
      %s51 = sphi 0, %s49
      %s52 = sphi 0, %s51
      %s66 = sphi 0, %s52
      %s70 = sphi 0, %s70
      %s72 = sphi 0, %s70
      %s73 = sphi 0, %s72
      %s87 = sphi 0, %s73
      %s93 = sphi 0, %s95
      %s96 = sphi 0, %s93
      %s97 = sphi 0, %s96
      %s113 = sphi 0, %s97
    $region4: #{tpu_custom_call.1} parent=1 // loop_header_branch
      %18 = sbr.rel (%p16) target = $region8
    $region5: #{tpu_custom_call.1} parent=1 // loop_body
      %s20 = ssub.s32 %s15, 1
      %s21 = ssub.s32 %s15, 2
      %s22 = sadd.s32 %s15, 1
      %s23 = ssub.s32 %s15, %s22
      %p24 = scmp.eq.s32.totalorder %s23, 0
      %s26 = sadd.s32 %s25, 1
      %s27 = scalar_select %p24, %s25, %s26
      %p30 = pneg %p24
      %p31 = scmp.eq.s32.totalorder %s15, 1
      %p32 = por %p30, %p31
      %p33 = scmp.ne.s32.totalorder %s25, %s28
      %p34 = scmp.eq.s32.totalorder %s15, 0
      %p35 = por %p33, %p34
      %p36 = scmp.ne.s32.totalorder %s25, %s28
      %p37 = scmp.eq.s32.totalorder %s20, 1
      %p38 = por %p36, %p37
      %p39 = scmp.ne.s32.totalorder %s28, %s29
      %p40 = scmp.eq.s32.totalorder %s20, 0
      %p41 = por %p39, %p40
      %p42 = scmp.ne.s32.totalorder %s28, %s29
      %p43 = scmp.eq.s32.totalorder %s21, 1
      %p44 = por %p42, %p43
      %p46 = scmp.ne.s32.totalorder %s29, %s45
      %p47 = scmp.eq.s32.totalorder %s21, 0
      %p48 = por %p46, %p47
      %s50 = sadd.s32 %s49, 1
      %p53 = scmp.eq.s32.totalorder %s15, 1
      %p54 = scmp.ne.s32.totalorder %s49, %s51
      %p55 = scmp.eq.s32.totalorder %s15, 0
      %p56 = por %p54, %p55
      %p57 = scmp.ne.s32.totalorder %s49, %s51
      %p58 = scmp.eq.s32.totalorder %s20, 1
      %p59 = por %p57, %p58
      %p60 = scmp.ne.s32.totalorder %s51, %s52
      %p61 = scmp.eq.s32.totalorder %s20, 0
      %p62 = por %p60, %p61
      %p63 = scmp.ne.s32.totalorder %s51, %s52
      %p64 = scmp.eq.s32.totalorder %s21, 1
      %p65 = por %p63, %p64
      %p67 = scmp.ne.s32.totalorder %s52, %s66
      %p68 = scmp.eq.s32.totalorder %s21, 0
      %p69 = por %p67, %p68
      %s71 = sadd.s32 %s70, 1
      %p74 = scmp.eq.s32.totalorder %s15, 1
      %p75 = scmp.ne.s32.totalorder %s70, %s72
      %p76 = scmp.eq.s32.totalorder %s15, 0
      %p77 = por %p75, %p76
      %p78 = scmp.ne.s32.totalorder %s70, %s72
      %p79 = scmp.eq.s32.totalorder %s20, 1
      %p80 = por %p78, %p79
      %p81 = scmp.ne.s32.totalorder %s72, %s73
      %p82 = scmp.eq.s32.totalorder %s20, 0
      %p83 = por %p81, %p82
      %p84 = scmp.ne.s32.totalorder %s72, %s73
      %p85 = scmp.eq.s32.totalorder %s21, 1
      %p86 = por %p84, %p85
      %p88 = scmp.ne.s32.totalorder %s73, %s87
      %p89 = scmp.eq.s32.totalorder %s21, 0
      %p90 = por %p88, %p89
      %s91 = ssub.s32 %s15, %s22
      %p92 = scmp.eq.s32.totalorder %s91, 0
      %s94 = sadd.s32 %s93, 1
      %s95 = scalar_select %p92, %s93, %s94
      %p98 = pneg %p92
      %p99 = scmp.eq.s32.totalorder %s15, 1
      %p100 = por %p98, %p99
      %p101 = scmp.ne.s32.totalorder %s93, %s96
      %p102 = scmp.eq.s32.totalorder %s15, 0
      %p103 = por %p101, %p102
      %p104 = scmp.ne.s32.totalorder %s93, %s96
      %p105 = scmp.eq.s32.totalorder %s20, 1
      %p106 = por %p104, %p105
      %p107 = scmp.ne.s32.totalorder %s96, %s97
      %p108 = scmp.eq.s32.totalorder %s20, 0
      %p109 = por %p107, %p108
      %p110 = scmp.ne.s32.totalorder %s96, %s97
      %p111 = scmp.eq.s32.totalorder %s21, 1
      %p112 = por %p110, %p111
      %p114 = scmp.ne.s32.totalorder %s97, %s113
      %p115 = scmp.eq.s32.totalorder %s21, 0
      %p116 = por %p114, %p115
      %p117 = scmp.le.s32.totalorder 1, %s15
      %p118 = scmp.lt.s32.totalorder %s15, 3
      %p119 = pnand %p117, %p118
      %p120 = pneg %p119
      // Predicated region
      $region9: #{tpu_custom_call.1} parent=5 // pred_check
        _
      $region10: #{tpu_custom_call.1} parent=5 // pred_check_branch
        %122 = sbr.rel (%p119) target = $region12
      $region11: #{tpu_custom_call.1} parent=5 // pred_region
        %s123 = ssub.s32 %s15, 1
        // Predicated region
        $region13: #{tpu_custom_call.1} parent=11 // pred_check
          %p124 = pneg %p62
        $region14: #{tpu_custom_call.1} parent=11 // pred_check_branch
          %126 = sbr.rel (%p124) target = $region16
        $region15: #{tpu_custom_call.1} parent=11 // pred_region
          _
        $region16: #{tpu_custom_call.1} parent=11 // pred_fallthru
          _
        // Predicated region
        $region17: #{tpu_custom_call.1} parent=11 // pred_check
          %p127 = pneg %p83
        $region18: #{tpu_custom_call.1} parent=11 // pred_check_branch
          %129 = sbr.rel (%p127) target = $region20
        $region19: #{tpu_custom_call.1} parent=11 // pred_region
          _
        $region20: #{tpu_custom_call.1} parent=11 // pred_fallthru
          _
      $region12: #{tpu_custom_call.1} parent=5 // pred_fallthru
        _
      %p130 = scmp.lt.s32.totalorder %s15, 2
      // Predicated region
      $region21: #{tpu_custom_call.1} parent=5 // pred_check
        %p131 = pneg %p130
      $region22: #{tpu_custom_call.1} parent=5 // pred_check_branch
        %133 = sbr.rel (%p131) target = $region24
      $region23: #{tpu_custom_call.1} parent=5 // pred_region
        // Predicated region
        $region25: #{tpu_custom_call.1} parent=23 // pred_check
          %p134 = pneg %p35
        $region26: #{tpu_custom_call.1} parent=23 // pred_check_branch
          %136 = sbr.rel (%p134) target = $region28
        $region27: #{tpu_custom_call.1} parent=23 // pred_region
          %s137 = sand.u32 %s25, 1
          %s138 = scalar_lea.sflag [#allocation5], %s137
          %s139 = sand.u32 %s25, 1
          %s140 = smul.addr %s139, 8
          %s141 = scalar_lea.vmem [#allocation4], %s140
          %s143 = ssub.s32 128, 128
          %144 = vsyncadd %s138, %s143
          %s145 = smul.addr %s15, 2
          %s146 = smul.addr %s145, 64
          %s147 = scalar_lea.hbm %s0, %s146
          %s149 = sshll.u32 %s141, 4
          %s150 = int_to_ptr.vmem [resolvable:$true] %s149
          %152 = dma.hbm_to_vmem [thread:$0]  %s147, 128, %s150, %s138
        $region28: #{tpu_custom_call.1} parent=23 // pred_fallthru
          _
      $region24: #{tpu_custom_call.1} parent=5 // pred_fallthru
        _
      %p153 = scmp.le.s32.totalorder 1, %s15
      %p154 = scmp.lt.s32.totalorder %s15, 3
      %p155 = pnand %p153, %p154
      %p156 = pneg %p155
      // Predicated region
      $region29: #{tpu_custom_call.1} parent=5 // pred_check
        _
      $region30: #{tpu_custom_call.1} parent=5 // pred_check_branch
        %158 = sbr.rel (%p155) target = $region32
      $region31: #{tpu_custom_call.1} parent=5 // pred_region
        %s159 = ssub.s32 %s15, 1
        %s160 = sand.u32 %s28, 1
        %s161 = scalar_lea.sflag [#allocation5], %s160
        %s162 = sand.u32 %s28, 1
        %s163 = smul.addr %s162, 8
        %s164 = scalar_lea.vmem [#allocation4], %s163
        // Predicated region
        $region33: #{tpu_custom_call.1} parent=31 // pred_check
          %p165 = pneg %p41
        $region34: #{tpu_custom_call.1} parent=31 // pred_check_branch
          %167 = sbr.rel (%p165) target = $region36
        $region35: #{tpu_custom_call.1} parent=31 // pred_region
          %168 = dma.done %s161, 128
        $region36: #{tpu_custom_call.1} parent=31 // pred_fallthru
          _
        %s169 = sand.u32 %s28, 1
        %s170 = scalar_lea.sflag [#allocation5], %s169
        %s171 = sand.u32 %s28, 1
        %s172 = smul.addr %s171, 8
        %s173 = scalar_lea.vmem [#allocation4], %s172
        %p174 = pneg %p41
        %p175 = pneg %p38
        %p176 = pneg %p62
        %p177 = pneg %p59
        %p178 = pneg %p83
        %p179 = pneg %p80
        %p180 = pneg %p109
        %p181 = pneg %p106
        %s182 = sand.u32 %s96, 1
        %s183 = scalar_lea.sflag [#allocation6], %s182
        %s184 = sand.u32 %s96, 1
        %s185 = smul.addr %s184, 16
        %s186 = scalar_lea.vmem [#allocation7], %s185
        %187 = vst [vmem:[#allocation2] sm:$0xff] 0.0
        %188 = vst [vmem:[#allocation2 + $0x8] sm:$0xff] 0.0
        %v189 = vld [vmem:[%s164] sm:$0xff]
        %190 = vst [vmem:[#allocation2 + $0x4] sm:$0xff] %v189
        %v191 = vlaneseq
        %v192 = vand.u32 %v191, 127
        %v193 = vadd.s32 %v192, 128
        %vm194 = vcmp.lt.s32.totalorder %v192, 0
        %v195 = vsub.s32 0, %v192
        %v196 = vsel %vm194, %v195, %v192
        %v197 = vshrl.u32 %v196, 4
        %v198 = vand.u32 %v196, 15
        %v199 = vsub.s32 0, %v198
        %v200 = vsel %vm194, %v199, %v198
        %vm201 = vcmp.lt.s32.totalorder %v193, 0
        %v202 = vsub.s32 0, %v193
        %v203 = vsel %vm201, %v202, %v193
        %v204 = vshrl.u32 %v203, 4
        %v205 = vand.u32 %v203, 15
        %v206 = vsub.s32 0, %v205
        %v207 = vsel %vm201, %v206, %v205
        %vm208 = vcmp.ne.s32.totalorder %v200, 0
        %vm209 = vcmp.ne.s32.totalorder %v207, 0
        %vm210 = vcmp.lt.s32.totalorder %v200, 0
        %vm211 = vcmp.lt.s32.totalorder %v207, 0
        %vm212 = vmand %vm210, %vm208
        %vm213 = vmand %vm211, %vm209
        %v214 = vadd.s32 %v200, 16
        %v215 = vadd.s32 %v207, 16
        %v216 = vsel %vm212, %v214, %v200
        %v217 = vsel %vm213, %v215, %v207
        %v218 = vld [vmem:[#allocation2] sm:$0xff]
        %v219 = vld [vmem:[#allocation2 + $0x8] sm:$0xf]
        %v220 = vadd.s32 %v216, 4294967295
        %v221 = vadd.s32 %v217, 4294967295
        %vm222 = vcmp.ge.s32.totalorder %v220, 0
        %vm223 = vcmp.ge.s32.totalorder %v221, 0
        %vm224 = vcmp.lt.s32.totalorder %v220, 16
        %vm225 = vcmp.lt.s32.totalorder %v221, 16
        %vm226 = vmand %vm222, %vm224
        %vm227 = vmand %vm223, %vm225
        %v228 = vsel %vm226, 1, 0
        %v229 = vsel %vm227, 1, 0
        %vm230 = vcmp.eq.s32.totalorder %v228, 1
        %vm231 = vcmp.eq.s32.totalorder %v229, 1
        %v234 = vcombine.high %v218, %v218
        %235 = vrot.lane.b32.xlu0 %v218, 17
        %v236 = vpop.permute.xlu0 %235
        %237 = vrot.lane.b32.xlu0 %v234, 17
        %v238 = vpop.permute.xlu0 %237
        %239 = vrot.lane.b32.xlu0 %v219, 17
        %v240 = vpop.permute.xlu0 %239
        %vm241 = vcmask 138240
        %v242 = vsel %vm241, %v236, %v238
        %v243 = vsel %vm241, %v238, %v240
        %v246 = vsel %vm230, %v242, 0.0
        %v247 = vsel %vm231, %v243, 0.0
        %248 = vst [vmem:[#allocation3] sm:$0xf] %v246
        %249 = vst [vmem:[#allocation3 + $0x8] sm:$0xf] %v247
        %v250 = vld [vmem:[#allocation2] sm:$0xff]
        %v251 = vld [vmem:[#allocation2 + $0x8] sm:$0xf]
        %v254 = vcombine.low %v250, %v250
        %v255 = vcombine.low %v251, %v251
        %256 = vrot.lane.b32.xlu0 %v254, 16
        %v257 = vpop.permute.xlu0 %256
        %258 = vrot.lane.b32.xlu0 %v250, 16
        %v259 = vpop.permute.xlu0 %258
        %260 = vrot.lane.b32.xlu0 %v255, 16
        %v261 = vpop.permute.xlu0 %260
        %vm262 = vcmask 130048
        %v263 = vsel %vm262, %v257, %v259
        %v264 = vsel %vm262, %v259, %v261
        %267 = vst [vmem:[#allocation3] sm:$0xf0] %v263
        %268 = vst [vmem:[#allocation3 + $0x8] sm:$0xf0] %v264
        %v269 = vld [vmem:[#allocation2] sm:$0xff]
        %v270 = vld [vmem:[#allocation2 + $0x8] sm:$0xf]
        %v271 = vadd.s32 %v216, 1
        %v272 = vadd.s32 %v217, 1
        %vm273 = vcmp.ge.s32.totalorder %v271, 0
        %vm274 = vcmp.ge.s32.totalorder %v272, 0
        %vm275 = vcmp.lt.s32.totalorder %v271, 16
        %vm276 = vcmp.lt.s32.totalorder %v272, 16
        %vm277 = vmand %vm273, %vm275
        %vm278 = vmand %vm274, %vm276
        %v279 = vsel %vm277, 1, 0
        %v280 = vsel %vm278, 1, 0
        %vm281 = vcmp.eq.s32.totalorder %v279, 1
        %vm282 = vcmp.eq.s32.totalorder %v280, 1
        %v285 = vcombine.high %v269, %v269
        %286 = vrot.lane.b32.xlu0 %v269, 15
        %v287 = vpop.permute.xlu0 %286
        %288 = vrot.lane.b32.xlu0 %v285, 15
        %v289 = vpop.permute.xlu0 %288
        %290 = vrot.lane.b32.xlu0 %v270, 15
        %v291 = vpop.permute.xlu0 %290
        %vm292 = vcmask 121856
        %v293 = vsel %vm292, %v287, %v289
        %v294 = vsel %vm292, %v289, %v291
        %v297 = vsel %vm281, %v293, 0.0
        %v298 = vsel %vm282, %v294, 0.0
        %299 = vst [vmem:[#allocation3 + $0x10] sm:$0xf] %v297
        %300 = vst [vmem:[#allocation3 + $0x18] sm:$0xf] %v298
        %v301 = vld [vmem:[#allocation2] sm:$0xff]
        %v302 = vld [vmem:[#allocation2 + $0x8] sm:$0xf]
        %v305 = vcombine.high %v301, %v301
        %306 = vrot.lane.b32.xlu0 %v301, 1
        %v307 = vpop.permute.xlu0 %306
        %308 = vrot.lane.b32.xlu0 %v305, 1
        %v309 = vpop.permute.xlu0 %308
        %310 = vrot.lane.b32.xlu0 %v302, 1
        %v311 = vpop.permute.xlu0 %310
        %vm312 = vcmask 7168
        %v313 = vsel %vm312, %v307, %v309
        %v314 = vsel %vm312, %v309, %v311
        %v317 = vsel %vm230, %v313, 0.0
        %v318 = vsel %vm231, %v314, 0.0
        %v321 = vrot.slane %v317, 4
        %v322 = vrot.slane %v318, 4
        %325 = vst [vmem:[#allocation3 + $0x10] sm:$0xf0] %v321
        %326 = vst [vmem:[#allocation3 + $0x18] sm:$0xf0] %v322
        %v327 = vld [vmem:[#allocation2 + $0x4] sm:$0xff]
        %v329 = vcombine.high %v327, %v327
        %331 = vst [vmem:[#allocation3 + $0x20] sm:$0xf] %v327
        %332 = vst [vmem:[#allocation3 + $0x28] sm:$0xf] %v329
        %v333 = vld [vmem:[#allocation2 + $0x4] sm:$0xff]
        %v334 = vld [vmem:[#allocation2 + $0xc] sm:$0xf]
        %v337 = vcombine.high %v333, %v333
        %338 = vrot.lane.b32.xlu0 %v333, 127
        %v339 = vpop.permute.xlu0 %338
        %340 = vrot.lane.b32.xlu0 %v337, 127
        %v341 = vpop.permute.xlu0 %340
        %342 = vrot.lane.b32.xlu0 %v334, 127
        %v343 = vpop.permute.xlu0 %342
        %vm344 = vcmask 1039360
        %v345 = vsel %vm344, %v339, %v341
        %v346 = vsel %vm344, %v341, %v343
        %v349 = vsel %vm281, %v345, 0.0
        %v350 = vsel %vm282, %v346, 0.0
        %v353 = vrot.slane %v349, 4
        %v354 = vrot.slane %v350, 4
        %357 = vst [vmem:[#allocation3 + $0x20] sm:$0xf0] %v353
        %358 = vst [vmem:[#allocation3 + $0x28] sm:$0xf0] %v354
        %v359 = vld [vmem:[#allocation2 + $0x4] sm:$0xff]
        %v360 = vld [vmem:[#allocation2 + $0xc] sm:$0xf]
        %v363 = vcombine.high %v359, %v359
        %364 = vrot.lane.b32.xlu0 %v359, 113
        %v365 = vpop.permute.xlu0 %364
        %366 = vrot.lane.b32.xlu0 %v363, 113
        %v367 = vpop.permute.xlu0 %366
        %368 = vrot.lane.b32.xlu0 %v360, 113
        %v369 = vpop.permute.xlu0 %368
        %vm370 = vcmask 924672
        %v371 = vsel %vm370, %v365, %v367
        %v372 = vsel %vm370, %v367, %v369
        %v375 = vsel %vm230, %v371, 0.0
        %v376 = vsel %vm231, %v372, 0.0
        %377 = vst [vmem:[#allocation3 + $0x30] sm:$0xf] %v375
        %378 = vst [vmem:[#allocation3 + $0x38] sm:$0xf] %v376
        %v379 = vld [vmem:[#allocation2 + $0x4] sm:$0xff]
        %v380 = vld [vmem:[#allocation2 + $0xc] sm:$0xf]
        %v383 = vcombine.low %v379, %v379
        %v384 = vcombine.low %v380, %v380
        %385 = vrot.lane.b32.xlu0 %v383, 112
        %v386 = vpop.permute.xlu0 %385
        %387 = vrot.lane.b32.xlu0 %v379, 112
        %v388 = vpop.permute.xlu0 %387
        %389 = vrot.lane.b32.xlu0 %v384, 112
        %v390 = vpop.permute.xlu0 %389
        %vm391 = vcmask 916480
        %v392 = vsel %vm391, %v386, %v388
        %v393 = vsel %vm391, %v388, %v390
        %396 = vst [vmem:[#allocation3 + $0x30] sm:$0xf0] %v392
        %397 = vst [vmem:[#allocation3 + $0x38] sm:$0xf0] %v393
        %v398 = vld [vmem:[#allocation2 + $0x4] sm:$0xff]
        %v399 = vld [vmem:[#allocation2 + $0xc] sm:$0xf]
        %v402 = vcombine.high %v398, %v398
        %403 = vrot.lane.b32.xlu0 %v398, 111
        %v404 = vpop.permute.xlu0 %403
        %405 = vrot.lane.b32.xlu0 %v402, 111
        %v406 = vpop.permute.xlu0 %405
        %407 = vrot.lane.b32.xlu0 %v399, 111
        %v408 = vpop.permute.xlu0 %407
        %vm409 = vcmask 908288
        %v410 = vsel %vm409, %v404, %v406
        %v411 = vsel %vm409, %v406, %v408
        %v414 = vsel %vm281, %v410, 0.0
        %v415 = vsel %vm282, %v411, 0.0
        %416 = vst [vmem:[#allocation3 + $0x40] sm:$0xf] %v414
        %417 = vst [vmem:[#allocation3 + $0x48] sm:$0xf] %v415
        %v418 = vld [vmem:[%s1] sm:$0xff]
        %v419 = vld [vmem:[#allocation3] sm:$0xff]
        %v420 = vld [vmem:[#allocation3 + $0x8] sm:$0xff]
        %v421 = vld [vmem:[#allocation3 + $0x10] sm:$0xff]
        %v422 = vld [vmem:[#allocation3 + $0x18] sm:$0xff]
        %v423 = vld [vmem:[#allocation3 + $0x20] sm:$0xff]
        %v424 = vld [vmem:[#allocation3 + $0x28] sm:$0xff]
        %v425 = vld [vmem:[#allocation3 + $0x30] sm:$0xff]
        %v426 = vld [vmem:[#allocation3 + $0x38] sm:$0xff]
        %v427 = vld [vmem:[#allocation3 + $0x40] sm:$0xf]
        %v428 = vld [vmem:[#allocation3 + $0x48] sm:$0xf]
        %v429 = vld [vmem:[%s2] sm:$0xff]
        %431 = vset.pattern.permute.xlu0 0
        %432 = vperm.xlu0 %431, %v429
        %v433 = vpop.permute.xlu0 %432
        %vm435 = vcmask 293888
        %v437 = vsel %vm435, %v418, 0
        %vm439 = vcmask 1043456
        %v441 = vsel %vm439, %v427, 0
        %v444 = vsel %vm439, %v428, 0
        %446 = vmatprep.subr.mxu0 %v420
        %447 = vmatpush1.msra.mxu0 %v419
        %448 = vmatprep.subr.mxu0 %v422
        %449 = vmatpush1.msra.mxu0 %v421
        %450 = vmatprep.subr.mxu0 %v424
        %451 = vmatpush1.msra.mxu0 %v423
        %452 = vmatprep.subr.mxu0 %v426
        %453 = vmatpush1.msra.mxu0 %v425
        %454 = vmatprep.subr.mxu0 %v444
        %455 = vmatpush1.msra.mxu0 %v441
        %456 = vmatprep.subr.mxu0 0.0
        %457 = vmatpush1.msra.mxu0 0.0
        %458 = vmatprep.subr.mxu0 0.0
        %459 = vmatpush1.msra.mxu0 0.0
        %460 = vmatprep.subr.mxu0 0.0
        %461 = vmatpush1.msra.mxu0 0.0
        %462 = vmatprep.subr.mxu0 0.0
        %463 = vmatpush1.msra.mxu0 0.0
        %464 = vmatprep.subr.mxu0 0.0
        %465 = vmatpush1.msra.mxu0 0.0
        %466 = vmatprep.subr.mxu0 0.0
        %467 = vmatpush1.msra.mxu0 0.0
        %468 = vmatprep.subr.mxu0 0.0
        %469 = vmatpush1.msra.mxu0 0.0
        %470 = vmatprep.subr.mxu0 0.0
        %471 = vmatpush1.msra.mxu0 0.0
        %472 = vmatprep.subr.mxu0 0.0
        %473 = vmatpush1.msra.mxu0 0.0
        %474 = vmatprep.subr.mxu0 0.0
        %475 = vmatpush1.msra.mxu0 0.0
        %476 = vmatprep.subr.mxu0 0.0
        %477 = vmatpush1.msra.mxu0 0.0
        %478 = vmatprep.subr.mxu0 0.0
        %479 = vmatpush1.msra.mxu0 0.0
        %480 = vmatprep.subr.mxu0 0.0
        %481 = vmatpush1.msra.mxu0 0.0
        %482 = vmatprep.subr.mxu0 0.0
        %483 = vmatpush1.msra.mxu0 0.0
        %484 = vmatprep.subr.mxu0 0.0
        %485 = vmatpush1.msra.mxu0 0.0
        %486 = vmatprep.subr.mxu0 0.0
        %487 = vmatpush1.msra.mxu0 0.0
        %488 = vmatprep.subr.mxu0 0.0
        %489 = vmatpush1.msra.mxu0 0.0
        %490 = vmatprep.subr.mxu0 0.0
        %491 = vmatpush1.msra.mxu0 0.0
        %492 = vmatprep.subr.mxu0 0.0
        %493 = vmatpush1.msra.mxu0 0.0
        %494 = vmatprep.subr.mxu0 0.0
        %495 = vmatpush1.msra.mxu0 0.0
        %496 = vmatprep.subr.mxu0 0.0
        %497 = vmatpush1.msra.mxu0 0.0
        %498 = vmatprep.subr.mxu0 0.0
        %499 = vmatpush1.msra.mxu0 0.0
        %500 = vmatprep.subr.mxu0 0.0
        %501 = vmatpush1.msra.mxu0 0.0
        %502 = vmatprep.subr.mxu0 0.0
        %503 = vmatpush1.msra.mxu0 0.0
        %504 = vmatprep.subr.mxu0 0.0
        %505 = vmatpush1.msra.mxu0 0.0
        %506 = vmatprep.subr.mxu0 0.0
        %507 = vmatpush1.msra.mxu0 0.0
        %508 = vmatprep.subr.mxu0 0.0
        %509 = vmatpush1.msra.mxu0 0.0
        %510 = vmatprep.mubr.f32.mxu0 0.0
        %511 = vmatmul.mubr.f32.gmra.mrb[0].mxu0 %v437
        %v512 = vpop.f32.mrb[0].mxu0
        %v513 = vadd.f32 %v433, %v512
        %v514 = vpop.f32.mrb[0].mxu0
        %v515 = vadd.f32 %v433, %v514
        %516 = vdwg.mxu0
        %v517 = vmax.f32 %v513, 0.0
        %v518 = vmax.f32 %v515, 0.0
        %519 = vst [vmem:[%s186] sm:$0xff] %v517
        %520 = vst [vmem:[%s186 + $0x8] sm:$0xff] %v518
        %s521 = sand.u32 %s96, 1
        %s522 = scalar_lea.sflag [#allocation6], %s521
        %s523 = sand.u32 %s96, 1
        %s524 = smul.addr %s523, 16
        %s525 = scalar_lea.vmem [#allocation7], %s524
        // Predicated region
        $region37: #{tpu_custom_call.1} parent=31 // pred_check
          %p526 = pneg %p106
        $region38: #{tpu_custom_call.1} parent=31 // pred_check_branch
          %528 = sbr.rel (%p526) target = $region40
        $region39: #{tpu_custom_call.1} parent=31 // pred_region
          %s530 = ssub.s32 256, 256
          %531 = vsyncadd %s522, %s530
          %s532 = smul.addr %s20, 2
          %s533 = smul.addr %s532, 128
          %s534 = scalar_lea.hbm %s3, %s533
          %s536 = sshll.u32 %s525, 4
          %s537 = int_to_ptr.vmem [resolvable:$true] %s536
          %539 = dma.vmem_to_hbm [thread:$0]  %s537, 256, %s534, %s522
        $region40: #{tpu_custom_call.1} parent=31 // pred_fallthru
          _
      $region32: #{tpu_custom_call.1} parent=5 // pred_fallthru
        _
      %p540 = scmp.le.s32.totalorder 2, %s15
      // Predicated region
      $region41: #{tpu_custom_call.1} parent=5 // pred_check
        %p541 = pneg %p540
      $region42: #{tpu_custom_call.1} parent=5 // pred_check_branch
        %543 = sbr.rel (%p541) target = $region44
      $region43: #{tpu_custom_call.1} parent=5 // pred_region
        %s544 = ssub.s32 %s15, 2
        // Predicated region
        $region45: #{tpu_custom_call.1} parent=43 // pred_check
          %p545 = pneg %p112
        $region46: #{tpu_custom_call.1} parent=43 // pred_check_branch
          %547 = sbr.rel (%p545) target = $region48
        $region47: #{tpu_custom_call.1} parent=43 // pred_region
          %s548 = sand.u32 %s97, 1
          %s549 = scalar_lea.sflag [#allocation6], %s548
          %s550 = sand.u32 %s97, 1
          %s551 = smul.addr %s550, 16
          %s552 = scalar_lea.vmem [#allocation7], %s551
          %553 = dma.done %s549, 256
        $region48: #{tpu_custom_call.1} parent=43 // pred_fallthru
          _
      $region44: #{tpu_custom_call.1} parent=5 // pred_fallthru
        _
    $region6: #{tpu_custom_call.1} parent=1 // loop_footer
      %s19 = sadd.s32 1, %s15
    $region7: #{tpu_custom_call.1} parent=1 // loop_footer_branch
      %14 = sbr.rel target = $region3
    $region8: #{tpu_custom_call.1} parent=1 // loop_exit
      _
    %554 = vsyncpa [#allocation5], 1
    %s555 = scalar_lea.sflag [#allocation5], 1
    %556 = vsyncpa %s555, 1
    %557 = vsyncpa [#allocation6], 1
    %s558 = scalar_lea.sflag [#allocation6], 1
    %559 = vsyncpa %s558, 1

</llo_original>
